<compile_context>
chip_gen: v6e
topology: v6e:2x2x1
jax: 0.10.0
libtpu: 0.0.40
codegen_flags: <defaults>
</compile_context>

<pallas_src>
import jax
import jax.numpy as jnp
from jax.experimental import pallas as pl
from jax.experimental.pallas import tpu as pltpu

K_IN = 28 * 28          # 784 (full last dim -> legal block width, no padding)
HID = 256
N_OUT = 10              # narrow f32 output written directly (bounded masked vst)


def ddnet_kernel(x_ref, w0_ref, wd_ref, wd2_ref, w2_ref, o_ref):
    # x arrives as raw f32 (no wrapper pad/cast pass); cast to bf16 on the VPU
    # so every matmul runs MXU-native bf16 operands with f32 accumulation.
    x = x_ref[...].astype(jnp.bfloat16)                                   # (TM, 784)
    h = jnp.dot(x, w0_ref[...], preferred_element_type=jnp.float32)      # (TM, 256) f32
    c = h                                                                 # keep f32 (v5e-safe)
    h = jnp.dot(h.astype(jnp.bfloat16), wd_ref[...],
                preferred_element_type=jnp.float32) * c
    h = jnp.dot(h.astype(jnp.bfloat16), wd2_ref[...],
                preferred_element_type=jnp.float32) * c
    o_ref[...] = jnp.dot(h.astype(jnp.bfloat16), w2_ref[...],
                         preferred_element_type=jnp.float32)              # (TM, 10) f32


def prepare_params(w_fc0, w_dd, w_dd2, w_fc2):
    """One-time weight prep: PyTorch (out,in) -> (in,out), bf16. No padding.

    Call once outside the per-step path; the results are reused every call.
    """
    w0t = w_fc0.T.astype(jnp.bfloat16)     # (784, 256)
    wdt = w_dd.T.astype(jnp.bfloat16)      # (256, 256)
    wd2t = w_dd2.T.astype(jnp.bfloat16)    # (256, 256)
    w2t = w_fc2.T.astype(jnp.bfloat16)     # (256, 10)
    return w0t, wdt, wd2t, w2t


def _pick_tm(batch, tm_max=1024):
    """Batch tile selection.

    * batch < 512: one block covering the whole batch (block dims equal the
      full array dims -> always legal, no padding, no ragged handling).
    * batch >= 512: split into an even number (>=2) of steps so v7x's two
      TensorCores both get work on the 'parallel' axis, with each step as
      close to tm_max rows as possible to amortize ~0.35us/step overhead.
    """
    if batch < 512:
        return batch
    steps = max(2, pl.cdiv(batch, tm_max))
    steps += steps % 2                          # even step count (megacore balance)
    return pl.cdiv(pl.cdiv(batch, steps), 8) * 8   # ceil(B/steps), sublane-aligned


def ddnet_forward(x, params):
    """x: (B, 784) float32 (raw, unpadded). params: output of prepare_params()."""
    w0t, wdt, wd2t, w2t = params
    B = x.shape[0]
    tm = _pick_tm(B)
    grid = (pl.cdiv(B, tm),)

    flops = 2 * B * (K_IN * HID + 2 * HID * HID + HID * N_OUT)
    bytes_accessed = (B * K_IN * 4
                      + (w0t.size + wdt.size + wd2t.size + w2t.size) * 2
                      + B * N_OUT * 4)

    return pl.pallas_call(
        ddnet_kernel,
        out_shape=jax.ShapeDtypeStruct((B, N_OUT), jnp.float32),
        grid=grid,
        in_specs=[
            # Raw f32 activations; 784 == full last dim so no lane padding needed.
            pl.BlockSpec((tm, K_IN), lambda i: (i, 0)),
            # Weights: constant block index -> resident in VMEM, not re-DMA'd.
            pl.BlockSpec((K_IN, HID), lambda i: (0, 0)),
            pl.BlockSpec((HID, HID), lambda i: (0, 0)),
            pl.BlockSpec((HID, HID), lambda i: (0, 0)),
            pl.BlockSpec((HID, N_OUT), lambda i: (0, 0)),
        ],
        out_specs=pl.BlockSpec((tm, N_OUT), lambda i: (i, 0)),
        compiler_params=pltpu.CompilerParams(
            dimension_semantics=("parallel",)),          # megacore split on v7x
        cost_estimate=pl.CostEstimate(flops=flops, transcendentals=0,
                                      bytes_accessed=bytes_accessed),
    )(x, w0t, wdt, wd2t, w2t)


def ddnet_reference(x, w_fc0, w_dd, w_dd2, w_fc2):
    """Reference mirroring the kernel's bf16-operand / f32-accumulate matmuls."""
    bf = lambda a: a.astype(jnp.bfloat16).astype(jnp.float32)
    mm = lambda a, b: jnp.matmul(bf(a), bf(b).T,
                                 precision=jax.lax.Precision.HIGHEST)
    h = mm(x, w_fc0)
    c = h
    h = mm(h, w_dd) * c
    h = mm(h, w_dd2) * c
    return mm(h, w_fc2)


if __name__ == "__main__":
    key = jax.random.PRNGKey(0)
    k_x, k0, k1, k2, k3 = jax.random.split(key, 5)

    # Deterministic parameter init (PyTorch Linear layout: (out_features, in_features)).
    def init_w(k, out_f, in_f):
        bound = 1.0 / (in_f ** 0.5)
        return jax.random.uniform(k, (out_f, in_f), jnp.float32, -bound, bound)

    w_fc0 = init_w(k0, HID, K_IN)
    w_dd = init_w(k1, HID, HID)
    w_dd2 = init_w(k2, HID, HID)
    w_fc2 = init_w(k3, N_OUT, HID)
    params = prepare_params(w_fc0, w_dd, w_dd2, w_fc2)   # one-time weight prep

    # Primary small-shape check: single block, dims equal full array dims.
    B = 8
    x = jax.random.normal(k_x, (B, K_IN), dtype=jnp.float32)
    out = jax.block_until_ready(ddnet_forward(x, params))
    ref = ddnet_reference(x, w_fc0, w_dd, w_dd2, w_fc2)
    assert out.shape == (B, N_OUT)
    assert jnp.allclose(out, ref, atol=5e-3, rtol=5e-3), "mismatch vs reference (B=8)"

    # Secondary check: multi-step 'parallel' grid with a ragged last block
    # (600 rows -> 2 tiles of 304 rows; stale rows of the last input tile only
    # feed their own masked-out output rows).
    B2 = 600
    x2 = jax.random.normal(k_x, (B2, K_IN), dtype=jnp.float32)
    out2 = jax.block_until_ready(ddnet_forward(x2, params))
    ref2 = ddnet_reference(x2, w_fc0, w_dd, w_dd2, w_fc2)
    assert out2.shape == (B2, N_OUT)
    assert jnp.allclose(out2, ref2, atol=5e-3, rtol=5e-3), "mismatch vs reference (B=600)"

    print("KERNEL_OK")
</pallas_src>

<mosaic_0001>
module attributes {stable_mosaic.version = 11 : i64} {
  func.func @ddnet_kernel(%arg0: i32, %arg1: memref<8x784xf32, #tpu.memory_space<vmem>>, %arg2: memref<784x256xbf16, #tpu.memory_space<vmem>>, %arg3: memref<256x256xbf16, #tpu.memory_space<vmem>>, %arg4: memref<256x256xbf16, #tpu.memory_space<vmem>>, %arg5: memref<256x10xbf16, #tpu.memory_space<vmem>>, %arg6: memref<8x10xf32, #tpu.memory_space<vmem>>) attributes {dimension_semantics = [#tpu.dimension_semantics<parallel>], iteration_bounds = array<i64: 1>, scalar_prefetch = 0 : i64, scratch_operands = 0 : i64, tpu.core_type = #tpu.core_type<tc>, window_params = [{transform_indices = @transform_0, window_bounds = array<i64: 8, 784>}, {pipeline_mode = #tpu.pipeline_mode<synchronous>, transform_indices = @transform_1, window_bounds = array<i64: 784, 256>}, {pipeline_mode = #tpu.pipeline_mode<synchronous>, transform_indices = @transform_2, window_bounds = array<i64: 256, 256>}, {pipeline_mode = #tpu.pipeline_mode<synchronous>, transform_indices = @transform_3, window_bounds = array<i64: 256, 256>}, {pipeline_mode = #tpu.pipeline_mode<synchronous>, transform_indices = @transform_4, window_bounds = array<i64: 256, 10>}, {transform_indices = @transform_5, window_bounds = array<i64: 8, 10>}]} {
    %c0 = arith.constant 0 : index
    %c0_0 = arith.constant 0 : index
    %0 = vector.load %arg1[%c0, %c0_0] : memref<8x784xf32, #tpu.memory_space<vmem>>, vector<8x784xf32>
    %1 = arith.truncf %0 : vector<8x784xf32> to vector<8x784xbf16>
    %c0_1 = arith.constant 0 : index
    %c0_2 = arith.constant 0 : index
    %2 = vector.load %arg2[%c0_1, %c0_2] : memref<784x256xbf16, #tpu.memory_space<vmem>>, vector<784x256xbf16>
    %cst = arith.constant dense<0.000000e+00> : vector<8x256xf32>
    %3 = tpu.matmul %1, %2, %cst {dimension_numbers = #tpu.dot_dimension_numbers<[1], [0], [0], [1], [0, 0, 1, 1], [], []>} : vector<8x784xbf16>, vector<784x256xbf16>, vector<8x256xf32> -> vector<8x256xf32>
    %4 = arith.truncf %3 : vector<8x256xf32> to vector<8x256xbf16>
    %c0_3 = arith.constant 0 : index
    %c0_4 = arith.constant 0 : index
    %5 = vector.load %arg3[%c0_3, %c0_4] : memref<256x256xbf16, #tpu.memory_space<vmem>>, vector<256x256xbf16>
    %cst_5 = arith.constant dense<0.000000e+00> : vector<8x256xf32>
    %6 = tpu.matmul %4, %5, %cst_5 {dimension_numbers = #tpu.dot_dimension_numbers<[1], [0], [0], [1], [0, 0, 1, 1], [], []>} : vector<8x256xbf16>, vector<256x256xbf16>, vector<8x256xf32> -> vector<8x256xf32>
    %7 = arith.mulf %6, %3 : vector<8x256xf32>
    %8 = arith.truncf %7 : vector<8x256xf32> to vector<8x256xbf16>
    %c0_6 = arith.constant 0 : index
    %c0_7 = arith.constant 0 : index
    %9 = vector.load %arg4[%c0_6, %c0_7] : memref<256x256xbf16, #tpu.memory_space<vmem>>, vector<256x256xbf16>
    %cst_8 = arith.constant dense<0.000000e+00> : vector<8x256xf32>
    %10 = tpu.matmul %8, %9, %cst_8 {dimension_numbers = #tpu.dot_dimension_numbers<[1], [0], [0], [1], [0, 0, 1, 1], [], []>} : vector<8x256xbf16>, vector<256x256xbf16>, vector<8x256xf32> -> vector<8x256xf32>
    %11 = arith.mulf %10, %3 : vector<8x256xf32>
    %12 = arith.truncf %11 : vector<8x256xf32> to vector<8x256xbf16>
    %c0_9 = arith.constant 0 : index
    %c0_10 = arith.constant 0 : index
    %13 = vector.load %arg5[%c0_9, %c0_10] : memref<256x10xbf16, #tpu.memory_space<vmem>>, vector<256x10xbf16>
    %cst_11 = arith.constant dense<0.000000e+00> : vector<8x10xf32>
    %14 = tpu.matmul %12, %13, %cst_11 {dimension_numbers = #tpu.dot_dimension_numbers<[1], [0], [0], [1], [0, 0, 1, 1], [], []>} : vector<8x256xbf16>, vector<256x10xbf16>, vector<8x10xf32> -> vector<8x10xf32>
    %c0_12 = arith.constant 0 : index
    %c0_13 = arith.constant 0 : index
    %15 = vector.load %arg6[%c0_12, %c0_13] : memref<8x10xf32, #tpu.memory_space<vmem>>, vector<8x10xf32>
    tpu.vector_store %arg6[%c0_12, %c0_13], %14 {strides = array<i32>} : memref<8x10xf32, #tpu.memory_space<vmem>>, vector<8x10xf32>,
    return
  }
  func.func @transform_0(%arg0: i32) -> (i32, i32) {
    %c0_i32 = arith.constant 0 : i32
    %c0_i32_0 = arith.constant 0 : i32
    return %arg0, %c0_i32 : i32, i32
  }
  func.func @transform_1(%arg0: i32) -> (i32, i32) {
    %c0_i32 = arith.constant 0 : i32
    %c0_i32_0 = arith.constant 0 : i32
    %c0_i32_1 = arith.constant 0 : i32
    return %c0_i32, %c0_i32_0 : i32, i32
  }
  func.func @transform_2(%arg0: i32) -> (i32, i32) {
    %c0_i32 = arith.constant 0 : i32
    %c0_i32_0 = arith.constant 0 : i32
    %c0_i32_1 = arith.constant 0 : i32
    return %c0_i32, %c0_i32_0 : i32, i32
  }
  func.func @transform_3(%arg0: i32) -> (i32, i32) {
    %c0_i32 = arith.constant 0 : i32
    %c0_i32_0 = arith.constant 0 : i32
    %c0_i32_1 = arith.constant 0 : i32
    return %c0_i32, %c0_i32_0 : i32, i32
  }
  func.func @transform_4(%arg0: i32) -> (i32, i32) {
    %c0_i32 = arith.constant 0 : i32
    %c0_i32_0 = arith.constant 0 : i32
    %c0_i32_1 = arith.constant 0 : i32
    return %c0_i32, %c0_i32_0 : i32, i32
  }
  func.func @transform_5(%arg0: i32) -> (i32, i32) {
    %c0_i32 = arith.constant 0 : i32
    %c0_i32_0 = arith.constant 0 : i32
    return %arg0, %c0_i32 : i32, i32
  }
}

</mosaic_0001>

<llo_original>
// kernel: tpu_custom_call.1
$region0: #{tpu_custom_call.1}
  #allocation0 [shape = 'u32[]', space=smem, size = 0x4, offset = 0x4, fixed_abs, tag = 'smem constant byte address 0x4 - core index']
  #allocation1 [shape = 'u32[144,128]{1,0:T(1,128)}', space=vmem, size = 0x12000, scoped, tag = 'internal scratch']
  %s0 = inlined_call_operand.vmem [shape: f32[8,784], index: 0, kind: input, shape index: {}]
  %s1 = inlined_call_operand.hbm [shape: bf16[784,256], index: 1, kind: input, shape index: {}]
  %s2 = inlined_call_operand.hbm [shape: bf16[256,256], index: 2, kind: input, shape index: {}]
  %s3 = inlined_call_operand.hbm [shape: bf16[256,256], index: 3, kind: input, shape index: {}]
  %s4 = inlined_call_operand.vmem [shape: bf16[256,10], index: 4, kind: input, shape index: {}]
  %s5 = inlined_call_operand.hbm [shape: f32[8,10], index: 5, kind: output, shape index: {}]
  %s6 = sld [smem:[#allocation0]]
  $region42: #{tpu_custom_call.1} parent=0
    _
  %s8 = ssub.s32 1, %s6
  %s9 = scalar_select 0, %s8, %s6
  $region1: #{tpu_custom_call.1} parent=0
    #allocation2 [shape = 'u8[401408]{0}', space=vmem, size = 0x62000, scoped, tag = 'input window, operand 1, single buffered']
    #allocation3 [shape = 's32[1]{0}', space=sflag, size = 0x4, scoped, tag = 'scoped memory for tpu_custom_call.1']
    #allocation4 [shape = 's32[1]{0}', space=sflag, size = 0x4, scoped, tag = 'scoped memory for tpu_custom_call.1']
    #allocation5 [shape = 'u8[131072]{0}', space=vmem, size = 0x20000, scoped, tag = 'input window, operand 2, single buffered']
    #allocation6 [shape = 's32[1]{0}', space=sflag, size = 0x4, scoped, tag = 'scoped memory for tpu_custom_call.1']
    #allocation7 [shape = 'u8[131072]{0}', space=vmem, size = 0x20000, scoped, tag = 'input window, operand 3, single buffered']
    #allocation8 [shape = 'u8[4096]{0}', space=vmem, size = 0x1000, scoped, tag = 'output window, operand 0, single buffered']
    %10 = vsyncpa [#allocation3], 0
    %11 = vsyncpa [#allocation6], 0
    %12 = vsyncpa [#allocation4], 0
    // Predicated region
    $region2: #{tpu_custom_call.1} parent=1 // pred_check
      _
    $region3: #{tpu_custom_call.1} parent=1 // pred_check_branch
      %14 = sbr.rel (0) target = $region5
    $region4: #{tpu_custom_call.1} parent=1 // pred_region
      _
    $region5: #{tpu_custom_call.1} parent=1 // pred_fallthru
      _
    // Predicated region
    $region6: #{tpu_custom_call.1} parent=1 // pred_check
      _
    $region7: #{tpu_custom_call.1} parent=1 // pred_check_branch
      %16 = sbr.rel (0) target = $region9
    $region8: #{tpu_custom_call.1} parent=1 // pred_region
      %s18 = ssub.s32 12544, 12544
      %19 = vsyncadd [#allocation3], %s18
      %s20 = sshll.u32 [#allocation2], 4
      %s21 = int_to_ptr.vmem [resolvable:$true] %s20
      %26 = dma.hbm_to_vmem [thread:$0]  %s1, 12544, %s21, [#allocation3], 128, 128, 8
    $region9: #{tpu_custom_call.1} parent=1 // pred_fallthru
      _
    // Predicated region
    $region10: #{tpu_custom_call.1} parent=1 // pred_check
      _
    $region11: #{tpu_custom_call.1} parent=1 // pred_check_branch
      %28 = sbr.rel (0) target = $region13
    $region12: #{tpu_custom_call.1} parent=1 // pred_region
      %s30 = ssub.s32 4096, 4096
      %31 = vsyncadd [#allocation6], %s30
      %s32 = sshll.u32 [#allocation5], 4
      %s33 = int_to_ptr.vmem [resolvable:$true] %s32
      %38 = dma.hbm_to_vmem [thread:$0]  %s2, 4096, %s33, [#allocation6], 128, 128, 8
    $region13: #{tpu_custom_call.1} parent=1 // pred_fallthru
      _
    // Predicated region
    $region14: #{tpu_custom_call.1} parent=1 // pred_check
      _
    $region15: #{tpu_custom_call.1} parent=1 // pred_check_branch
      %40 = sbr.rel (0) target = $region17
    $region16: #{tpu_custom_call.1} parent=1 // pred_region
      %s42 = ssub.s32 4096, 4096
      %43 = vsyncadd [#allocation6], %s42
      %s44 = sshll.u32 [#allocation7], 4
      %s45 = int_to_ptr.vmem [resolvable:$true] %s44
      %50 = dma.hbm_to_vmem [thread:$0]  %s3, 4096, %s45, [#allocation6], 128, 128, 8
    $region17: #{tpu_custom_call.1} parent=1 // pred_fallthru
      _
    // Predicated region
    $region18: #{tpu_custom_call.1} parent=1 // pred_check
      _
    $region19: #{tpu_custom_call.1} parent=1 // pred_check_branch
      %52 = sbr.rel (0) target = $region21
    $region20: #{tpu_custom_call.1} parent=1 // pred_region
      _
    $region21: #{tpu_custom_call.1} parent=1 // pred_fallthru
      _
    // Predicated region
    $region22: #{tpu_custom_call.1} parent=1 // pred_check
      _
    $region23: #{tpu_custom_call.1} parent=1 // pred_check_branch
      %54 = sbr.rel (0) target = $region25
    $region24: #{tpu_custom_call.1} parent=1 // pred_region
      %55 = dma.done [#allocation3], 12544
    $region25: #{tpu_custom_call.1} parent=1 // pred_fallthru
      _
    // Predicated region
    $region26: #{tpu_custom_call.1} parent=1 // pred_check
      _
    $region27: #{tpu_custom_call.1} parent=1 // pred_check_branch
      %57 = sbr.rel (0) target = $region29
    $region28: #{tpu_custom_call.1} parent=1 // pred_region
      %58 = dma.done [#allocation6], 4096
    $region29: #{tpu_custom_call.1} parent=1 // pred_fallthru
      _
    // Predicated region
    $region30: #{tpu_custom_call.1} parent=1 // pred_check
      _
    $region31: #{tpu_custom_call.1} parent=1 // pred_check_branch
      %60 = sbr.rel (0) target = $region33
    $region32: #{tpu_custom_call.1} parent=1 // pred_region
      %61 = dma.done [#allocation6], 4096
    $region33: #{tpu_custom_call.1} parent=1 // pred_fallthru
      _
    %v63 = vld [vmem:[%s0] sm:$0xff]
    %v64 = vld [vmem:[%s0 + $0x8] sm:$0xff]
    %v65 = vld [vmem:[%s0 + $0x10] sm:$0xff]
    %v66 = vld [vmem:[%s0 + $0x18] sm:$0xff]
    %v67 = vld [vmem:[%s0 + $0x20] sm:$0xff]
    %v68 = vld [vmem:[%s0 + $0x28] sm:$0xff]
    %v69 = vld [vmem:[%s0 + $0x30] sm:$0xff]
    %v70 = vpack.c.bf16 %v63, %v63
    %v71 = vpack.c.bf16 %v64, %v64
    %v72 = vpack.c.bf16 %v65, %v65
    %v73 = vpack.c.bf16 %v66, %v66
    %v74 = vpack.c.bf16 %v67, %v67
    %v75 = vpack.c.bf16 %v68, %v68
    %v76 = vpack.c.bf16 %v69, %v69
    %v77 = vld [vmem:[#allocation2] sm:$0xff]
    %v78 = vld [vmem:[#allocation2 + $0x8] sm:$0xff]
    %v79 = vld [vmem:[#allocation2 + $0x10] sm:$0xff]
    %v80 = vld [vmem:[#allocation2 + $0x18] sm:$0xff]
    %v81 = vld [vmem:[#allocation2 + $0x20] sm:$0xff]
    %v82 = vld [vmem:[#allocation2 + $0x28] sm:$0xff]
    %v83 = vld [vmem:[#allocation2 + $0x30] sm:$0xff]
    %v84 = vld [vmem:[#allocation2 + $0x38] sm:$0xff]
    %v85 = vld [vmem:[#allocation2 + $0x40] sm:$0xff]
    %v86 = vld [vmem:[#allocation2 + $0x48] sm:$0xff]
    %v87 = vld [vmem:[#allocation2 + $0x50] sm:$0xff]
    %v88 = vld [vmem:[#allocation2 + $0x58] sm:$0xff]
    %v89 = vld [vmem:[#allocation2 + $0x60] sm:$0xff]
    %v90 = vld [vmem:[#allocation2 + $0x68] sm:$0xff]
    %v91 = vld [vmem:[#allocation2 + $0x70] sm:$0xff]
    %v92 = vld [vmem:[#allocation2 + $0x78] sm:$0xff]
    %v93 = vld [vmem:[#allocation2 + $0x80] sm:$0xff]
    %v94 = vld [vmem:[#allocation2 + $0x88] sm:$0xff]
    %v95 = vld [vmem:[#allocation2 + $0x90] sm:$0xff]
    %v96 = vld [vmem:[#allocation2 + $0x98] sm:$0xff]
    %v97 = vld [vmem:[#allocation2 + $0xa0] sm:$0xff]
    %v98 = vld [vmem:[#allocation2 + $0xa8] sm:$0xff]
    %v99 = vld [vmem:[#allocation2 + $0xb0] sm:$0xff]
    %v100 = vld [vmem:[#allocation2 + $0xb8] sm:$0xff]
    %v101 = vld [vmem:[#allocation2 + $0xc0] sm:$0xff]
    %v102 = vld [vmem:[#allocation2 + $0xc8] sm:$0xff]
    %v103 = vld [vmem:[#allocation2 + $0xd0] sm:$0xff]
    %v104 = vld [vmem:[#allocation2 + $0xd8] sm:$0xff]
    %v105 = vld [vmem:[#allocation2 + $0xe0] sm:$0xff]
    %v106 = vld [vmem:[#allocation2 + $0xe8] sm:$0xff]
    %v107 = vld [vmem:[#allocation2 + $0xf0] sm:$0xff]
    %v108 = vld [vmem:[#allocation2 + $0xf8] sm:$0xff]
    %v109 = vld [vmem:[#allocation2 + $0x100] sm:$0xff]
    %v110 = vld [vmem:[#allocation2 + $0x108] sm:$0xff]
    %v111 = vld [vmem:[#allocation2 + $0x110] sm:$0xff]
    %v112 = vld [vmem:[#allocation2 + $0x118] sm:$0xff]
    %v113 = vld [vmem:[#allocation2 + $0x120] sm:$0xff]
    %v114 = vld [vmem:[#allocation2 + $0x128] sm:$0xff]
    %v115 = vld [vmem:[#allocation2 + $0x130] sm:$0xff]
    %v116 = vld [vmem:[#allocation2 + $0x138] sm:$0xff]
    %v117 = vld [vmem:[#allocation2 + $0x140] sm:$0xff]
    %v118 = vld [vmem:[#allocation2 + $0x148] sm:$0xff]
    %v119 = vld [vmem:[#allocation2 + $0x150] sm:$0xff]
    %v120 = vld [vmem:[#allocation2 + $0x158] sm:$0xff]
    %v121 = vld [vmem:[#allocation2 + $0x160] sm:$0xff]
    %v122 = vld [vmem:[#allocation2 + $0x168] sm:$0xff]
    %v123 = vld [vmem:[#allocation2 + $0x170] sm:$0xff]
    %v124 = vld [vmem:[#allocation2 + $0x178] sm:$0xff]
    %v125 = vld [vmem:[#allocation2 + $0x180] sm:$0xff]
    %v126 = vld [vmem:[#allocation2 + $0x188] sm:$0xff]
    %v127 = vld [vmem:[#allocation2 + $0x190] sm:$0xff]
    %v128 = vld [vmem:[#allocation2 + $0x198] sm:$0xff]
    %v129 = vld [vmem:[#allocation2 + $0x1a0] sm:$0xff]
    %v130 = vld [vmem:[#allocation2 + $0x1a8] sm:$0xff]
    %v131 = vld [vmem:[#allocation2 + $0x1b0] sm:$0xff]
    %v132 = vld [vmem:[#allocation2 + $0x1b8] sm:$0xff]
    %v133 = vld [vmem:[#allocation2 + $0x1c0] sm:$0xff]
    %v134 = vld [vmem:[#allocation2 + $0x1c8] sm:$0xff]
    %v135 = vld [vmem:[#allocation2 + $0x1d0] sm:$0xff]
    %v136 = vld [vmem:[#allocation2 + $0x1d8] sm:$0xff]
    %v137 = vld [vmem:[#allocation2 + $0x1e0] sm:$0xff]
    %v138 = vld [vmem:[#allocation2 + $0x1e8] sm:$0xff]
    %v139 = vld [vmem:[#allocation2 + $0x1f0] sm:$0xff]
    %v140 = vld [vmem:[#allocation2 + $0x1f8] sm:$0xff]
    %v141 = vld [vmem:[#allocation2 + $0x200] sm:$0xff]
    %v142 = vld [vmem:[#allocation2 + $0x208] sm:$0xff]
    %v143 = vld [vmem:[#allocation2 + $0x210] sm:$0xff]
    %v144 = vld [vmem:[#allocation2 + $0x218] sm:$0xff]
    %v145 = vld [vmem:[#allocation2 + $0x220] sm:$0xff]
    %v146 = vld [vmem:[#allocation2 + $0x228] sm:$0xff]
    %v147 = vld [vmem:[#allocation2 + $0x230] sm:$0xff]
    %v148 = vld [vmem:[#allocation2 + $0x238] sm:$0xff]
    %v149 = vld [vmem:[#allocation2 + $0x240] sm:$0xff]
    %v150 = vld [vmem:[#allocation2 + $0x248] sm:$0xff]
    %v151 = vld [vmem:[#allocation2 + $0x250] sm:$0xff]
    %v152 = vld [vmem:[#allocation2 + $0x258] sm:$0xff]
    %v153 = vld [vmem:[#allocation2 + $0x260] sm:$0xff]
    %v154 = vld [vmem:[#allocation2 + $0x268] sm:$0xff]
    %v155 = vld [vmem:[#allocation2 + $0x270] sm:$0xff]
    %v156 = vld [vmem:[#allocation2 + $0x278] sm:$0xff]
    %v157 = vld [vmem:[#allocation2 + $0x280] sm:$0xff]
    %v158 = vld [vmem:[#allocation2 + $0x288] sm:$0xff]
    %v159 = vld [vmem:[#allocation2 + $0x290] sm:$0xff]
    %v160 = vld [vmem:[#allocation2 + $0x298] sm:$0xff]
    %v161 = vld [vmem:[#allocation2 + $0x2a0] sm:$0xff]
    %v162 = vld [vmem:[#allocation2 + $0x2a8] sm:$0xff]
    %v163 = vld [vmem:[#allocation2 + $0x2b0] sm:$0xff]
    %v164 = vld [vmem:[#allocation2 + $0x2b8] sm:$0xff]
    %v165 = vld [vmem:[#allocation2 + $0x2c0] sm:$0xff]
    %v166 = vld [vmem:[#allocation2 + $0x2c8] sm:$0xff]
    %v167 = vld [vmem:[#allocation2 + $0x2d0] sm:$0xff]
    %v168 = vld [vmem:[#allocation2 + $0x2d8] sm:$0xff]
    %v169 = vld [vmem:[#allocation2 + $0x2e0] sm:$0xff]
    %v170 = vld [vmem:[#allocation2 + $0x2e8] sm:$0xff]
    %v171 = vld [vmem:[#allocation2 + $0x2f0] sm:$0xff]
    %v172 = vld [vmem:[#allocation2 + $0x2f8] sm:$0xff]
    %v173 = vld [vmem:[#allocation2 + $0x300] sm:$0xff]
    %v174 = vld [vmem:[#allocation2 + $0x308] sm:$0xff]
    %v273 = vunpack.c.l.b16 %v77
    %v274 = vunpack.c.h.b16 %v77
    %v275 = vunpack.c.l.b16 %v78
    %v276 = vunpack.c.h.b16 %v78
    %v277 = vunpack.c.l.b16 %v79
    %v278 = vunpack.c.h.b16 %v79
    %v279 = vunpack.c.l.b16 %v80
    %v280 = vunpack.c.h.b16 %v80
    %v281 = vunpack.c.l.b16 %v81
    %v282 = vunpack.c.h.b16 %v81
    %v283 = vunpack.c.l.b16 %v82
    %v284 = vunpack.c.h.b16 %v82
    %v285 = vunpack.c.l.b16 %v83
    %v286 = vunpack.c.h.b16 %v83
    %v287 = vunpack.c.l.b16 %v84
    %v288 = vunpack.c.h.b16 %v84
    %v289 = vunpack.c.l.b16 %v85
    %v290 = vunpack.c.h.b16 %v85
    %v291 = vunpack.c.l.b16 %v86
    %v292 = vunpack.c.h.b16 %v86
    %v293 = vunpack.c.l.b16 %v87
    %v294 = vunpack.c.h.b16 %v87
    %v295 = vunpack.c.l.b16 %v88
    %v296 = vunpack.c.h.b16 %v88
    %v297 = vunpack.c.l.b16 %v89
    %v298 = vunpack.c.h.b16 %v89
    %v299 = vunpack.c.l.b16 %v90
    %v300 = vunpack.c.h.b16 %v90
    %v301 = vunpack.c.l.b16 %v91
    %v302 = vunpack.c.h.b16 %v91
    %v303 = vunpack.c.l.b16 %v92
    %v304 = vunpack.c.h.b16 %v92
    %v305 = vunpack.c.l.b16 %v93
    %v306 = vunpack.c.h.b16 %v93
    %v307 = vunpack.c.l.b16 %v94
    %v308 = vunpack.c.h.b16 %v94
    %v309 = vunpack.c.l.b16 %v95
    %v310 = vunpack.c.h.b16 %v95
    %v311 = vunpack.c.l.b16 %v96
    %v312 = vunpack.c.h.b16 %v96
    %v313 = vunpack.c.l.b16 %v97
    %v314 = vunpack.c.h.b16 %v97
    %v315 = vunpack.c.l.b16 %v98
    %v316 = vunpack.c.h.b16 %v98
    %v317 = vunpack.c.l.b16 %v99
    %v318 = vunpack.c.h.b16 %v99
    %v319 = vunpack.c.l.b16 %v100
    %v320 = vunpack.c.h.b16 %v100
    %v321 = vunpack.c.l.b16 %v101
    %v322 = vunpack.c.h.b16 %v101
    %v323 = vunpack.c.l.b16 %v102
    %v324 = vunpack.c.h.b16 %v102
    %v325 = vunpack.c.l.b16 %v103
    %v326 = vunpack.c.h.b16 %v103
    %v327 = vunpack.c.l.b16 %v104
    %v328 = vunpack.c.h.b16 %v104
    %v329 = vunpack.c.l.b16 %v105
    %v330 = vunpack.c.h.b16 %v105
    %v331 = vunpack.c.l.b16 %v106
    %v332 = vunpack.c.h.b16 %v106
    %v333 = vunpack.c.l.b16 %v107
    %v334 = vunpack.c.h.b16 %v107
    %v335 = vunpack.c.l.b16 %v108
    %v336 = vunpack.c.h.b16 %v108
    %v337 = vunpack.c.l.b16 %v109
    %v338 = vunpack.c.h.b16 %v109
    %v339 = vunpack.c.l.b16 %v110
    %v340 = vunpack.c.h.b16 %v110
    %v341 = vunpack.c.l.b16 %v111
    %v342 = vunpack.c.h.b16 %v111
    %v343 = vunpack.c.l.b16 %v112
    %v344 = vunpack.c.h.b16 %v112
    %v345 = vunpack.c.l.b16 %v113
    %v346 = vunpack.c.h.b16 %v113
    %v347 = vunpack.c.l.b16 %v114
    %v348 = vunpack.c.h.b16 %v114
    %v349 = vunpack.c.l.b16 %v115
    %v350 = vunpack.c.h.b16 %v115
    %v351 = vunpack.c.l.b16 %v116
    %v352 = vunpack.c.h.b16 %v116
    %v353 = vunpack.c.l.b16 %v117
    %v354 = vunpack.c.h.b16 %v117
    %v355 = vunpack.c.l.b16 %v118
    %v356 = vunpack.c.h.b16 %v118
    %v357 = vunpack.c.l.b16 %v119
    %v358 = vunpack.c.h.b16 %v119
    %v359 = vunpack.c.l.b16 %v120
    %v360 = vunpack.c.h.b16 %v120
    %v361 = vunpack.c.l.b16 %v121
    %v362 = vunpack.c.h.b16 %v121
    %v363 = vunpack.c.l.b16 %v122
    %v364 = vunpack.c.h.b16 %v122
    %v365 = vunpack.c.l.b16 %v123
    %v366 = vunpack.c.h.b16 %v123
    %v367 = vunpack.c.l.b16 %v124
    %v368 = vunpack.c.h.b16 %v124
    %v369 = vunpack.c.l.b16 %v125
    %v370 = vunpack.c.h.b16 %v125
    %v371 = vunpack.c.l.b16 %v126
    %v372 = vunpack.c.h.b16 %v126
    %v373 = vunpack.c.l.b16 %v127
    %v374 = vunpack.c.h.b16 %v127
    %v375 = vunpack.c.l.b16 %v128
    %v376 = vunpack.c.h.b16 %v128
    %v377 = vunpack.c.l.b16 %v129
    %v378 = vunpack.c.h.b16 %v129
    %v379 = vunpack.c.l.b16 %v130
    %v380 = vunpack.c.h.b16 %v130
    %v381 = vunpack.c.l.b16 %v131
    %v382 = vunpack.c.h.b16 %v131
    %v383 = vunpack.c.l.b16 %v132
    %v384 = vunpack.c.h.b16 %v132
    %v385 = vunpack.c.l.b16 %v133
    %v386 = vunpack.c.h.b16 %v133
    %v387 = vunpack.c.l.b16 %v134
    %v388 = vunpack.c.h.b16 %v134
    %v389 = vunpack.c.l.b16 %v135
    %v390 = vunpack.c.h.b16 %v135
    %v391 = vunpack.c.l.b16 %v136
    %v392 = vunpack.c.h.b16 %v136
    %v393 = vunpack.c.l.b16 %v137
    %v394 = vunpack.c.h.b16 %v137
    %v395 = vunpack.c.l.b16 %v138
    %v396 = vunpack.c.h.b16 %v138
    %v397 = vunpack.c.l.b16 %v139
    %v398 = vunpack.c.h.b16 %v139
    %v399 = vunpack.c.l.b16 %v140
    %v400 = vunpack.c.h.b16 %v140
    %v401 = vunpack.c.l.b16 %v141
    %v402 = vunpack.c.h.b16 %v141
    %v403 = vunpack.c.l.b16 %v142
    %v404 = vunpack.c.h.b16 %v142
    %v405 = vunpack.c.l.b16 %v143
    %v406 = vunpack.c.h.b16 %v143
    %v407 = vunpack.c.l.b16 %v144
    %v408 = vunpack.c.h.b16 %v144
    %v409 = vunpack.c.l.b16 %v145
    %v410 = vunpack.c.h.b16 %v145
    %v411 = vunpack.c.l.b16 %v146
    %v412 = vunpack.c.h.b16 %v146
    %v413 = vunpack.c.l.b16 %v147
    %v414 = vunpack.c.h.b16 %v147
    %v415 = vunpack.c.l.b16 %v148
    %v416 = vunpack.c.h.b16 %v148
    %v417 = vunpack.c.l.b16 %v149
    %v418 = vunpack.c.h.b16 %v149
    %v419 = vunpack.c.l.b16 %v150
    %v420 = vunpack.c.h.b16 %v150
    %v421 = vunpack.c.l.b16 %v151
    %v422 = vunpack.c.h.b16 %v151
    %v423 = vunpack.c.l.b16 %v152
    %v424 = vunpack.c.h.b16 %v152
    %v425 = vunpack.c.l.b16 %v153
    %v426 = vunpack.c.h.b16 %v153
    %v427 = vunpack.c.l.b16 %v154
    %v428 = vunpack.c.h.b16 %v154
    %v429 = vunpack.c.l.b16 %v155
    %v430 = vunpack.c.h.b16 %v155
    %v431 = vunpack.c.l.b16 %v156
    %v432 = vunpack.c.h.b16 %v156
    %v433 = vunpack.c.l.b16 %v157
    %v434 = vunpack.c.h.b16 %v157
    %v435 = vunpack.c.l.b16 %v158
    %v436 = vunpack.c.h.b16 %v158
    %v437 = vunpack.c.l.b16 %v159
    %v438 = vunpack.c.h.b16 %v159
    %v439 = vunpack.c.l.b16 %v160
    %v440 = vunpack.c.h.b16 %v160
    %v441 = vunpack.c.l.b16 %v161
    %v442 = vunpack.c.h.b16 %v161
    %v443 = vunpack.c.l.b16 %v162
    %v444 = vunpack.c.h.b16 %v162
    %v445 = vunpack.c.l.b16 %v163
    %v446 = vunpack.c.h.b16 %v163
    %v447 = vunpack.c.l.b16 %v164
    %v448 = vunpack.c.h.b16 %v164
    %v449 = vunpack.c.l.b16 %v165
    %v450 = vunpack.c.h.b16 %v165
    %v451 = vunpack.c.l.b16 %v166
    %v452 = vunpack.c.h.b16 %v166
    %v453 = vunpack.c.l.b16 %v167
    %v454 = vunpack.c.h.b16 %v167
    %v455 = vunpack.c.l.b16 %v168
    %v456 = vunpack.c.h.b16 %v168
    %v457 = vunpack.c.l.b16 %v169
    %v458 = vunpack.c.h.b16 %v169
    %v459 = vunpack.c.l.b16 %v170
    %v460 = vunpack.c.h.b16 %v170
    %v461 = vunpack.c.l.b16 %v171
    %v462 = vunpack.c.h.b16 %v171
    %v463 = vunpack.c.l.b16 %v172
    %v464 = vunpack.c.h.b16 %v172
    %v465 = vunpack.c.l.b16 %v173
    %v466 = vunpack.c.h.b16 %v173
    %v467 = vunpack.c.l.b16 %v174
    %v468 = vunpack.c.h.b16 %v174
    %v469 = vpack.c.b16 %v275, %v273
    %v470 = vpack.c.b16 %v276, %v274
    %v471 = vpack.c.b16 %v279, %v277
    %v472 = vpack.c.b16 %v280, %v278
    %v473 = vpack.c.b16 %v283, %v281
    %v474 = vpack.c.b16 %v284, %v282
    %v475 = vpack.c.b16 %v287, %v285
    %v476 = vpack.c.b16 %v288, %v286
    %v477 = vpack.c.b16 %v291, %v289
    %v478 = vpack.c.b16 %v292, %v290
    %v479 = vpack.c.b16 %v295, %v293
    %v480 = vpack.c.b16 %v296, %v294
    %v481 = vpack.c.b16 %v299, %v297
    %v482 = vpack.c.b16 %v300, %v298
    %v483 = vpack.c.b16 %v303, %v301
    %v484 = vpack.c.b16 %v304, %v302
    %v485 = vpack.c.b16 %v307, %v305
    %v486 = vpack.c.b16 %v308, %v306
    %v487 = vpack.c.b16 %v311, %v309
    %v488 = vpack.c.b16 %v312, %v310
    %v489 = vpack.c.b16 %v315, %v313
    %v490 = vpack.c.b16 %v316, %v314
    %v491 = vpack.c.b16 %v319, %v317
    %v492 = vpack.c.b16 %v320, %v318
    %v493 = vpack.c.b16 %v323, %v321
    %v494 = vpack.c.b16 %v324, %v322
    %v495 = vpack.c.b16 %v327, %v325
    %v496 = vpack.c.b16 %v328, %v326
    %v497 = vpack.c.b16 %v331, %v329
    %v498 = vpack.c.b16 %v332, %v330
    %v499 = vpack.c.b16 %v335, %v333
    %v500 = vpack.c.b16 %v336, %v334
    %v501 = vpack.c.b16 %v339, %v337
    %v502 = vpack.c.b16 %v340, %v338
    %v503 = vpack.c.b16 %v343, %v341
    %v504 = vpack.c.b16 %v344, %v342
    %v505 = vpack.c.b16 %v347, %v345
    %v506 = vpack.c.b16 %v348, %v346
    %v507 = vpack.c.b16 %v351, %v349
    %v508 = vpack.c.b16 %v352, %v350
    %v509 = vpack.c.b16 %v355, %v353
    %v510 = vpack.c.b16 %v356, %v354
    %v511 = vpack.c.b16 %v359, %v357
    %v512 = vpack.c.b16 %v360, %v358
    %v513 = vpack.c.b16 %v363, %v361
    %v514 = vpack.c.b16 %v364, %v362
    %v515 = vpack.c.b16 %v367, %v365
    %v516 = vpack.c.b16 %v368, %v366
    %v517 = vpack.c.b16 %v371, %v369
    %v518 = vpack.c.b16 %v372, %v370
    %v519 = vpack.c.b16 %v375, %v373
    %v520 = vpack.c.b16 %v376, %v374
    %v521 = vpack.c.b16 %v379, %v377
    %v522 = vpack.c.b16 %v380, %v378
    %v523 = vpack.c.b16 %v383, %v381
    %v524 = vpack.c.b16 %v384, %v382
    %v525 = vpack.c.b16 %v387, %v385
    %v526 = vpack.c.b16 %v388, %v386
    %v527 = vpack.c.b16 %v391, %v389
    %v528 = vpack.c.b16 %v392, %v390
    %v529 = vpack.c.b16 %v395, %v393
    %v530 = vpack.c.b16 %v396, %v394
    %v531 = vpack.c.b16 %v399, %v397
    %v532 = vpack.c.b16 %v400, %v398
    %v533 = vpack.c.b16 %v403, %v401
    %v534 = vpack.c.b16 %v404, %v402
    %v535 = vpack.c.b16 %v407, %v405
    %v536 = vpack.c.b16 %v408, %v406
    %v537 = vpack.c.b16 %v411, %v409
    %v538 = vpack.c.b16 %v412, %v410
    %v539 = vpack.c.b16 %v415, %v413
    %v540 = vpack.c.b16 %v416, %v414
    %v541 = vpack.c.b16 %v419, %v417
    %v542 = vpack.c.b16 %v420, %v418
    %v543 = vpack.c.b16 %v423, %v421
    %v544 = vpack.c.b16 %v424, %v422
    %v545 = vpack.c.b16 %v427, %v425
    %v546 = vpack.c.b16 %v428, %v426
    %v547 = vpack.c.b16 %v431, %v429
    %v548 = vpack.c.b16 %v432, %v430
    %v549 = vpack.c.b16 %v435, %v433
    %v550 = vpack.c.b16 %v436, %v434
    %v551 = vpack.c.b16 %v439, %v437
    %v552 = vpack.c.b16 %v440, %v438
    %v553 = vpack.c.b16 %v443, %v441
    %v554 = vpack.c.b16 %v444, %v442
    %v555 = vpack.c.b16 %v447, %v445
    %v556 = vpack.c.b16 %v448, %v446
    %v557 = vpack.c.b16 %v451, %v449
    %v558 = vpack.c.b16 %v452, %v450
    %v559 = vpack.c.b16 %v455, %v453
    %v560 = vpack.c.b16 %v456, %v454
    %v561 = vpack.c.b16 %v459, %v457
    %v562 = vpack.c.b16 %v460, %v458
    %v563 = vpack.c.b16 %v463, %v461
    %v564 = vpack.c.b16 %v464, %v462
    %v565 = vpack.c.b16 %v467, %v465
    %v566 = vpack.c.b16 %v468, %v466
    %vm665 = vcmask 130048
    %v667 = vsel %vm665, %v76, 0
    %669 = vmatprep.subr.bf16.mxu0 %v484
    %670 = vmatpush1.bf16.msra.mxu0 %v483
    %671 = vmatprep.subr.bf16.mxu0 %v482
    %672 = vmatpush1.bf16.msra.mxu0 %v481
    %673 = vmatprep.subr.bf16.mxu0 %v480
    %674 = vmatpush1.bf16.msra.mxu0 %v479
    %675 = vmatprep.subr.bf16.mxu0 %v478
    %676 = vmatpush1.bf16.msra.mxu0 %v477
    %677 = vmatprep.subr.bf16.mxu0 %v476
    %678 = vmatpush1.bf16.msra.mxu0 %v475
    %679 = vmatprep.subr.bf16.mxu0 %v474
    %680 = vmatpush1.bf16.msra.mxu0 %v473
    %681 = vmatprep.subr.bf16.mxu0 %v472
    %682 = vmatpush1.bf16.msra.mxu0 %v471
    %683 = vmatprep.subr.bf16.mxu0 %v470
    %684 = vmatpush1.bf16.msra.mxu0 %v469
    %685 = vmatprep.subr.bf16.mxu0 %v500
    %686 = vmatpush2.bf16.msra.mxu0 %v499
    %687 = vmatprep.subr.bf16.mxu0 %v498
    %688 = vmatpush2.bf16.msra.mxu0 %v497
    %689 = vmatprep.subr.bf16.mxu0 %v496
    %690 = vmatpush2.bf16.msra.mxu0 %v495
    %691 = vmatprep.subr.bf16.mxu0 %v494
    %692 = vmatpush2.bf16.msra.mxu0 %v493
    %693 = vmatprep.subr.bf16.mxu0 %v492
    %694 = vmatpush2.bf16.msra.mxu0 %v491
    %695 = vmatprep.subr.bf16.mxu0 %v490
    %696 = vmatpush2.bf16.msra.mxu0 %v489
    %697 = vmatprep.subr.bf16.mxu0 %v488
    %698 = vmatpush2.bf16.msra.mxu0 %v487
    %699 = vmatprep.subr.bf16.mxu0 %v486
    %700 = vmatpush2.bf16.msra.mxu0 %v485
    %701 = vmatprep.mubr.bf16.mxu0 %v71
    %702 = vmatmul.mubr.bf16.gmra.mxu0 %v70
    %v703 = vpop.f32.mrf.mxu0
    %v704 = vadd.f32 0.0, %v703
    %v705 = vpop.f32.mrf.mxu0
    %v706 = vadd.f32 0.0, %v705
    %v707 = vpop.f32.mrf.mxu0
    %v708 = vpop.f32.mrf.mxu0
    %709 = vdwg.mxu0
    %710 = vmatprep.subr.bf16.mxu0 %v516
    %711 = vmatpush1.bf16.msra.mxu0 %v515
    %712 = vmatprep.subr.bf16.mxu0 %v514
    %713 = vmatpush1.bf16.msra.mxu0 %v513
    %714 = vmatprep.subr.bf16.mxu0 %v512
    %715 = vmatpush1.bf16.msra.mxu0 %v511
    %716 = vmatprep.subr.bf16.mxu0 %v510
    %717 = vmatpush1.bf16.msra.mxu0 %v509
    %718 = vmatprep.subr.bf16.mxu0 %v508
    %719 = vmatpush1.bf16.msra.mxu0 %v507
    %720 = vmatprep.subr.bf16.mxu0 %v506
    %721 = vmatpush1.bf16.msra.mxu0 %v505
    %722 = vmatprep.subr.bf16.mxu0 %v504
    %723 = vmatpush1.bf16.msra.mxu0 %v503
    %724 = vmatprep.subr.bf16.mxu0 %v502
    %725 = vmatpush1.bf16.msra.mxu0 %v501
    %726 = vmatprep.subr.bf16.mxu0 %v532
    %727 = vmatpush2.bf16.msra.mxu0 %v531
    %728 = vmatprep.subr.bf16.mxu0 %v530
    %729 = vmatpush2.bf16.msra.mxu0 %v529
    %730 = vmatprep.subr.bf16.mxu0 %v528
    %731 = vmatpush2.bf16.msra.mxu0 %v527
    %732 = vmatprep.subr.bf16.mxu0 %v526
    %733 = vmatpush2.bf16.msra.mxu0 %v525
    %734 = vmatprep.subr.bf16.mxu0 %v524
    %735 = vmatpush2.bf16.msra.mxu0 %v523
    %736 = vmatprep.subr.bf16.mxu0 %v522
    %737 = vmatpush2.bf16.msra.mxu0 %v521
    %738 = vmatprep.subr.bf16.mxu0 %v520
    %739 = vmatpush2.bf16.msra.mxu0 %v519
    %740 = vmatprep.subr.bf16.mxu0 %v518
    %741 = vmatpush2.bf16.msra.mxu0 %v517
    %742 = vmatprep.mubr.bf16.mxu0 %v73
    %743 = vmatmul.mubr.bf16.gmra.mxu0 %v72
    %v744 = vpop.f32.mrf.mxu0
    %v745 = vadd.f32 %v704, %v744
    %v746 = vpop.f32.mrf.mxu0
    %v747 = vadd.f32 %v706, %v746
    %v748 = vpop.f32.mrf.mxu0
    %v749 = vpop.f32.mrf.mxu0
    %750 = vdwg.mxu0
    %751 = vmatprep.subr.bf16.mxu0 %v548
    %752 = vmatpush1.bf16.msra.mxu0 %v547
    %753 = vmatprep.subr.bf16.mxu0 %v546
    %754 = vmatpush1.bf16.msra.mxu0 %v545
    %755 = vmatprep.subr.bf16.mxu0 %v544
    %756 = vmatpush1.bf16.msra.mxu0 %v543
    %757 = vmatprep.subr.bf16.mxu0 %v542
    %758 = vmatpush1.bf16.msra.mxu0 %v541
    %759 = vmatprep.subr.bf16.mxu0 %v540
    %760 = vmatpush1.bf16.msra.mxu0 %v539
    %761 = vmatprep.subr.bf16.mxu0 %v538
    %762 = vmatpush1.bf16.msra.mxu0 %v537
    %763 = vmatprep.subr.bf16.mxu0 %v536
    %764 = vmatpush1.bf16.msra.mxu0 %v535
    %765 = vmatprep.subr.bf16.mxu0 %v534
    %766 = vmatpush1.bf16.msra.mxu0 %v533
    %767 = vmatprep.subr.bf16.mxu0 %v564
    %768 = vmatpush2.bf16.msra.mxu0 %v563
    %769 = vmatprep.subr.bf16.mxu0 %v562
    %770 = vmatpush2.bf16.msra.mxu0 %v561
    %771 = vmatprep.subr.bf16.mxu0 %v560
    %772 = vmatpush2.bf16.msra.mxu0 %v559
    %773 = vmatprep.subr.bf16.mxu0 %v558
    %774 = vmatpush2.bf16.msra.mxu0 %v557
    %775 = vmatprep.subr.bf16.mxu0 %v556
    %776 = vmatpush2.bf16.msra.mxu0 %v555
    %777 = vmatprep.subr.bf16.mxu0 %v554
    %778 = vmatpush2.bf16.msra.mxu0 %v553
    %779 = vmatprep.subr.bf16.mxu0 %v552
    %780 = vmatpush2.bf16.msra.mxu0 %v551
    %781 = vmatprep.subr.bf16.mxu0 %v550
    %782 = vmatpush2.bf16.msra.mxu0 %v549
    %783 = vmatprep.mubr.bf16.mxu0 %v75
    %784 = vmatmul.mubr.bf16.gmra.mxu0 %v74
    %v785 = vpop.f32.mrf.mxu0
    %v786 = vadd.f32 %v745, %v785
    %v787 = vpop.f32.mrf.mxu0
    %v788 = vadd.f32 %v747, %v787
    %v789 = vpop.f32.mrf.mxu0
    %v790 = vpop.f32.mrf.mxu0
    %791 = vdwg.mxu0
    %792 = vmatprep.subr.bf16.mxu0 0
    %793 = vmatpush1.bf16.msra.mxu0 0
    %794 = vmatprep.subr.bf16.mxu0 0
    %795 = vmatpush1.bf16.msra.mxu0 0
    %796 = vmatprep.subr.bf16.mxu0 0
    %797 = vmatpush1.bf16.msra.mxu0 0
    %798 = vmatprep.subr.bf16.mxu0 0
    %799 = vmatpush1.bf16.msra.mxu0 0
    %800 = vmatprep.subr.bf16.mxu0 0
    %801 = vmatpush1.bf16.msra.mxu0 0
    %802 = vmatprep.subr.bf16.mxu0 0
    %803 = vmatpush1.bf16.msra.mxu0 0
    %804 = vmatprep.subr.bf16.mxu0 0
    %805 = vmatpush1.bf16.msra.mxu0 0
    %806 = vmatprep.subr.bf16.mxu0 %v566
    %807 = vmatpush1.bf16.msra.mxu0 %v565
    %808 = vmatprep.subr.bf16.mxu0 0
    %809 = vmatpush2.bf16.msra.mxu0 0
    %810 = vmatprep.subr.bf16.mxu0 0
    %811 = vmatpush2.bf16.msra.mxu0 0
    %812 = vmatprep.subr.bf16.mxu0 0
    %813 = vmatpush2.bf16.msra.mxu0 0
    %814 = vmatprep.subr.bf16.mxu0 0
    %815 = vmatpush2.bf16.msra.mxu0 0
    %816 = vmatprep.subr.bf16.mxu0 0
    %817 = vmatpush2.bf16.msra.mxu0 0
    %818 = vmatprep.subr.bf16.mxu0 0
    %819 = vmatpush2.bf16.msra.mxu0 0
    %820 = vmatprep.subr.bf16.mxu0 0
    %821 = vmatpush2.bf16.msra.mxu0 0
    %822 = vmatprep.subr.bf16.mxu0 0
    %823 = vmatpush2.bf16.msra.mxu0 0
    %824 = vmatprep.mubr.bf16.mxu0 0
    %825 = vmatmul.mubr.bf16.gmra.mxu0 %v667
    %v826 = vpop.f32.mrf.mxu0
    %v827 = vadd.f32 %v786, %v826
    %v828 = vpop.f32.mrf.mxu0
    %v829 = vadd.f32 %v788, %v828
    %v830 = vpop.f32.mrf.mxu0
    %v831 = vpop.f32.mrf.mxu0
    %832 = vdwg.mxu0
    %v833 = vpack.c.bf16 %v827, %v827
    %v834 = vpack.c.bf16 %v829, %v829
    %v835 = vld [vmem:[#allocation5] sm:$0xff]
    %v836 = vld [vmem:[#allocation5 + $0x8] sm:$0xff]
    %v837 = vld [vmem:[#allocation5 + $0x10] sm:$0xff]
    %v838 = vld [vmem:[#allocation5 + $0x18] sm:$0xff]
    %v839 = vld [vmem:[#allocation5 + $0x20] sm:$0xff]
    %v840 = vld [vmem:[#allocation5 + $0x28] sm:$0xff]
    %v841 = vld [vmem:[#allocation5 + $0x30] sm:$0xff]
    %v842 = vld [vmem:[#allocation5 + $0x38] sm:$0xff]
    %v843 = vld [vmem:[#allocation5 + $0x40] sm:$0xff]
    %v844 = vld [vmem:[#allocation5 + $0x48] sm:$0xff]
    %v845 = vld [vmem:[#allocation5 + $0x50] sm:$0xff]
    %v846 = vld [vmem:[#allocation5 + $0x58] sm:$0xff]
    %v847 = vld [vmem:[#allocation5 + $0x60] sm:$0xff]
    %v848 = vld [vmem:[#allocation5 + $0x68] sm:$0xff]
    %v849 = vld [vmem:[#allocation5 + $0x70] sm:$0xff]
    %v850 = vld [vmem:[#allocation5 + $0x78] sm:$0xff]
    %v851 = vld [vmem:[#allocation5 + $0x80] sm:$0xff]
    %v852 = vld [vmem:[#allocation5 + $0x88] sm:$0xff]
    %v853 = vld [vmem:[#allocation5 + $0x90] sm:$0xff]
    %v854 = vld [vmem:[#allocation5 + $0x98] sm:$0xff]
    %v855 = vld [vmem:[#allocation5 + $0xa0] sm:$0xff]
    %v856 = vld [vmem:[#allocation5 + $0xa8] sm:$0xff]
    %v857 = vld [vmem:[#allocation5 + $0xb0] sm:$0xff]
    %v858 = vld [vmem:[#allocation5 + $0xb8] sm:$0xff]
    %v859 = vld [vmem:[#allocation5 + $0xc0] sm:$0xff]
    %v860 = vld [vmem:[#allocation5 + $0xc8] sm:$0xff]
    %v861 = vld [vmem:[#allocation5 + $0xd0] sm:$0xff]
    %v862 = vld [vmem:[#allocation5 + $0xd8] sm:$0xff]
    %v863 = vld [vmem:[#allocation5 + $0xe0] sm:$0xff]
    %v864 = vld [vmem:[#allocation5 + $0xe8] sm:$0xff]
    %v865 = vld [vmem:[#allocation5 + $0xf0] sm:$0xff]
    %v866 = vld [vmem:[#allocation5 + $0xf8] sm:$0xff]
    %v899 = vunpack.c.l.b16 %v835
    %v900 = vunpack.c.h.b16 %v835
    %v901 = vunpack.c.l.b16 %v836
    %v902 = vunpack.c.h.b16 %v836
    %v903 = vunpack.c.l.b16 %v837
    %v904 = vunpack.c.h.b16 %v837
    %v905 = vunpack.c.l.b16 %v838
    %v906 = vunpack.c.h.b16 %v838
    %v907 = vunpack.c.l.b16 %v839
    %v908 = vunpack.c.h.b16 %v839
    %v909 = vunpack.c.l.b16 %v840
    %v910 = vunpack.c.h.b16 %v840
    %v911 = vunpack.c.l.b16 %v841
    %v912 = vunpack.c.h.b16 %v841
    %v913 = vunpack.c.l.b16 %v842
    %v914 = vunpack.c.h.b16 %v842
    %v915 = vunpack.c.l.b16 %v843
    %v916 = vunpack.c.h.b16 %v843
    %v917 = vunpack.c.l.b16 %v844
    %v918 = vunpack.c.h.b16 %v844
    %v919 = vunpack.c.l.b16 %v845
    %v920 = vunpack.c.h.b16 %v845
    %v921 = vunpack.c.l.b16 %v846
    %v922 = vunpack.c.h.b16 %v846
    %v923 = vunpack.c.l.b16 %v847
    %v924 = vunpack.c.h.b16 %v847
    %v925 = vunpack.c.l.b16 %v848
    %v926 = vunpack.c.h.b16 %v848
    %v927 = vunpack.c.l.b16 %v849
    %v928 = vunpack.c.h.b16 %v849
    %v929 = vunpack.c.l.b16 %v850
    %v930 = vunpack.c.h.b16 %v850
    %v931 = vunpack.c.l.b16 %v851
    %v932 = vunpack.c.h.b16 %v851
    %v933 = vunpack.c.l.b16 %v852
    %v934 = vunpack.c.h.b16 %v852
    %v935 = vunpack.c.l.b16 %v853
    %v936 = vunpack.c.h.b16 %v853
    %v937 = vunpack.c.l.b16 %v854
    %v938 = vunpack.c.h.b16 %v854
    %v939 = vunpack.c.l.b16 %v855
    %v940 = vunpack.c.h.b16 %v855
    %v941 = vunpack.c.l.b16 %v856
    %v942 = vunpack.c.h.b16 %v856
    %v943 = vunpack.c.l.b16 %v857
    %v944 = vunpack.c.h.b16 %v857
    %v945 = vunpack.c.l.b16 %v858
    %v946 = vunpack.c.h.b16 %v858
    %v947 = vunpack.c.l.b16 %v859
    %v948 = vunpack.c.h.b16 %v859
    %v949 = vunpack.c.l.b16 %v860
    %v950 = vunpack.c.h.b16 %v860
    %v951 = vunpack.c.l.b16 %v861
    %v952 = vunpack.c.h.b16 %v861
    %v953 = vunpack.c.l.b16 %v862
    %v954 = vunpack.c.h.b16 %v862
    %v955 = vunpack.c.l.b16 %v863
    %v956 = vunpack.c.h.b16 %v863
    %v957 = vunpack.c.l.b16 %v864
    %v958 = vunpack.c.h.b16 %v864
    %v959 = vunpack.c.l.b16 %v865
    %v960 = vunpack.c.h.b16 %v865
    %v961 = vunpack.c.l.b16 %v866
    %v962 = vunpack.c.h.b16 %v866
    %v963 = vpack.c.b16 %v901, %v899
    %v964 = vpack.c.b16 %v902, %v900
    %v965 = vpack.c.b16 %v905, %v903
    %v966 = vpack.c.b16 %v906, %v904
    %v967 = vpack.c.b16 %v909, %v907
    %v968 = vpack.c.b16 %v910, %v908
    %v969 = vpack.c.b16 %v913, %v911
    %v970 = vpack.c.b16 %v914, %v912
    %v971 = vpack.c.b16 %v917, %v915
    %v972 = vpack.c.b16 %v918, %v916
    %v973 = vpack.c.b16 %v921, %v919
    %v974 = vpack.c.b16 %v922, %v920
    %v975 = vpack.c.b16 %v925, %v923
    %v976 = vpack.c.b16 %v926, %v924
    %v977 = vpack.c.b16 %v929, %v927
    %v978 = vpack.c.b16 %v930, %v928
    %v979 = vpack.c.b16 %v933, %v931
    %v980 = vpack.c.b16 %v934, %v932
    %v981 = vpack.c.b16 %v937, %v935
    %v982 = vpack.c.b16 %v938, %v936
    %v983 = vpack.c.b16 %v941, %v939
    %v984 = vpack.c.b16 %v942, %v940
    %v985 = vpack.c.b16 %v945, %v943
    %v986 = vpack.c.b16 %v946, %v944
    %v987 = vpack.c.b16 %v949, %v947
    %v988 = vpack.c.b16 %v950, %v948
    %v989 = vpack.c.b16 %v953, %v951
    %v990 = vpack.c.b16 %v954, %v952
    %v991 = vpack.c.b16 %v957, %v955
    %v992 = vpack.c.b16 %v958, %v956
    %v993 = vpack.c.b16 %v961, %v959
    %v994 = vpack.c.b16 %v962, %v960
    %1027 = vmatprep.subr.bf16.mxu0 %v978
    %1028 = vmatpush1.bf16.msra.mxu0 %v977
    %1029 = vmatprep.subr.bf16.mxu0 %v976
    %1030 = vmatpush1.bf16.msra.mxu0 %v975
    %1031 = vmatprep.subr.bf16.mxu0 %v974
    %1032 = vmatpush1.bf16.msra.mxu0 %v973
    %1033 = vmatprep.subr.bf16.mxu0 %v972
    %1034 = vmatpush1.bf16.msra.mxu0 %v971
    %1035 = vmatprep.subr.bf16.mxu0 %v970
    %1036 = vmatpush1.bf16.msra.mxu0 %v969
    %1037 = vmatprep.subr.bf16.mxu0 %v968
    %1038 = vmatpush1.bf16.msra.mxu0 %v967
    %1039 = vmatprep.subr.bf16.mxu0 %v966
    %1040 = vmatpush1.bf16.msra.mxu0 %v965
    %1041 = vmatprep.subr.bf16.mxu0 %v964
    %1042 = vmatpush1.bf16.msra.mxu0 %v963
    %1043 = vmatprep.subr.bf16.mxu0 %v994
    %1044 = vmatpush2.bf16.msra.mxu0 %v993
    %1045 = vmatprep.subr.bf16.mxu0 %v992
    %1046 = vmatpush2.bf16.msra.mxu0 %v991
    %1047 = vmatprep.subr.bf16.mxu0 %v990
    %1048 = vmatpush2.bf16.msra.mxu0 %v989
    %1049 = vmatprep.subr.bf16.mxu0 %v988
    %1050 = vmatpush2.bf16.msra.mxu0 %v987
    %1051 = vmatprep.subr.bf16.mxu0 %v986
    %1052 = vmatpush2.bf16.msra.mxu0 %v985
    %1053 = vmatprep.subr.bf16.mxu0 %v984
    %1054 = vmatpush2.bf16.msra.mxu0 %v983
    %1055 = vmatprep.subr.bf16.mxu0 %v982
    %1056 = vmatpush2.bf16.msra.mxu0 %v981
    %1057 = vmatprep.subr.bf16.mxu0 %v980
    %1058 = vmatpush2.bf16.msra.mxu0 %v979
    %1059 = vmatprep.mubr.bf16.mxu0 %v834
    %1060 = vmatmul.mubr.bf16.gmra.mxu0 %v833
    %v1061 = vpop.f32.mrf.mxu0
    %v1062 = vadd.f32 0.0, %v1061
    %v1063 = vpop.f32.mrf.mxu0
    %v1064 = vadd.f32 0.0, %v1063
    %v1065 = vpop.f32.mrf.mxu0
    %v1066 = vpop.f32.mrf.mxu0
    %1067 = vdwg.mxu0
    %v1068 = vmul.f32 %v1062, %v827
    %v1069 = vmul.f32 %v1064, %v829
    %v1070 = vpack.c.bf16 %v1068, %v1068
    %v1071 = vpack.c.bf16 %v1069, %v1069
    %v1072 = vld [vmem:[#allocation7] sm:$0xff]
    %v1073 = vld [vmem:[#allocation7 + $0x8] sm:$0xff]
    %v1074 = vld [vmem:[#allocation7 + $0x10] sm:$0xff]
    %v1075 = vld [vmem:[#allocation7 + $0x18] sm:$0xff]
    %v1076 = vld [vmem:[#allocation7 + $0x20] sm:$0xff]
    %v1077 = vld [vmem:[#allocation7 + $0x28] sm:$0xff]
    %v1078 = vld [vmem:[#allocation7 + $0x30] sm:$0xff]
    %v1079 = vld [vmem:[#allocation7 + $0x38] sm:$0xff]
    %v1080 = vld [vmem:[#allocation7 + $0x40] sm:$0xff]
    %v1081 = vld [vmem:[#allocation7 + $0x48] sm:$0xff]
    %v1082 = vld [vmem:[#allocation7 + $0x50] sm:$0xff]
    %v1083 = vld [vmem:[#allocation7 + $0x58] sm:$0xff]
    %v1084 = vld [vmem:[#allocation7 + $0x60] sm:$0xff]
    %v1085 = vld [vmem:[#allocation7 + $0x68] sm:$0xff]
    %v1086 = vld [vmem:[#allocation7 + $0x70] sm:$0xff]
    %v1087 = vld [vmem:[#allocation7 + $0x78] sm:$0xff]
    %v1088 = vld [vmem:[#allocation7 + $0x80] sm:$0xff]
    %v1089 = vld [vmem:[#allocation7 + $0x88] sm:$0xff]
    %v1090 = vld [vmem:[#allocation7 + $0x90] sm:$0xff]
    %v1091 = vld [vmem:[#allocation7 + $0x98] sm:$0xff]
    %v1092 = vld [vmem:[#allocation7 + $0xa0] sm:$0xff]
    %v1093 = vld [vmem:[#allocation7 + $0xa8] sm:$0xff]
    %v1094 = vld [vmem:[#allocation7 + $0xb0] sm:$0xff]
    %v1095 = vld [vmem:[#allocation7 + $0xb8] sm:$0xff]
    %v1096 = vld [vmem:[#allocation7 + $0xc0] sm:$0xff]
    %v1097 = vld [vmem:[#allocation7 + $0xc8] sm:$0xff]
    %v1098 = vld [vmem:[#allocation7 + $0xd0] sm:$0xff]
    %v1099 = vld [vmem:[#allocation7 + $0xd8] sm:$0xff]
    %v1100 = vld [vmem:[#allocation7 + $0xe0] sm:$0xff]
    %v1101 = vld [vmem:[#allocation7 + $0xe8] sm:$0xff]
    %v1102 = vld [vmem:[#allocation7 + $0xf0] sm:$0xff]
    %v1103 = vld [vmem:[#allocation7 + $0xf8] sm:$0xff]
    %v1136 = vunpack.c.l.b16 %v1072
    %v1137 = vunpack.c.h.b16 %v1072
    %v1138 = vunpack.c.l.b16 %v1073
    %v1139 = vunpack.c.h.b16 %v1073
    %v1140 = vunpack.c.l.b16 %v1074
    %v1141 = vunpack.c.h.b16 %v1074
    %v1142 = vunpack.c.l.b16 %v1075
    %v1143 = vunpack.c.h.b16 %v1075
    %v1144 = vunpack.c.l.b16 %v1076
    %v1145 = vunpack.c.h.b16 %v1076
    %v1146 = vunpack.c.l.b16 %v1077
    %v1147 = vunpack.c.h.b16 %v1077
    %v1148 = vunpack.c.l.b16 %v1078
    %v1149 = vunpack.c.h.b16 %v1078
    %v1150 = vunpack.c.l.b16 %v1079
    %v1151 = vunpack.c.h.b16 %v1079
    %v1152 = vunpack.c.l.b16 %v1080
    %v1153 = vunpack.c.h.b16 %v1080
    %v1154 = vunpack.c.l.b16 %v1081
    %v1155 = vunpack.c.h.b16 %v1081
    %v1156 = vunpack.c.l.b16 %v1082
    %v1157 = vunpack.c.h.b16 %v1082
    %v1158 = vunpack.c.l.b16 %v1083
    %v1159 = vunpack.c.h.b16 %v1083
    %v1160 = vunpack.c.l.b16 %v1084
    %v1161 = vunpack.c.h.b16 %v1084
    %v1162 = vunpack.c.l.b16 %v1085
    %v1163 = vunpack.c.h.b16 %v1085
    %v1164 = vunpack.c.l.b16 %v1086
    %v1165 = vunpack.c.h.b16 %v1086
    %v1166 = vunpack.c.l.b16 %v1087
    %v1167 = vunpack.c.h.b16 %v1087
    %v1168 = vunpack.c.l.b16 %v1088
    %v1169 = vunpack.c.h.b16 %v1088
    %v1170 = vunpack.c.l.b16 %v1089
    %v1171 = vunpack.c.h.b16 %v1089
    %v1172 = vunpack.c.l.b16 %v1090
    %v1173 = vunpack.c.h.b16 %v1090
    %v1174 = vunpack.c.l.b16 %v1091
    %v1175 = vunpack.c.h.b16 %v1091
    %v1176 = vunpack.c.l.b16 %v1092
    %v1177 = vunpack.c.h.b16 %v1092
    %v1178 = vunpack.c.l.b16 %v1093
    %v1179 = vunpack.c.h.b16 %v1093
    %v1180 = vunpack.c.l.b16 %v1094
    %v1181 = vunpack.c.h.b16 %v1094
    %v1182 = vunpack.c.l.b16 %v1095
    %v1183 = vunpack.c.h.b16 %v1095
    %v1184 = vunpack.c.l.b16 %v1096
    %v1185 = vunpack.c.h.b16 %v1096
    %v1186 = vunpack.c.l.b16 %v1097
    %v1187 = vunpack.c.h.b16 %v1097
    %v1188 = vunpack.c.l.b16 %v1098
    %v1189 = vunpack.c.h.b16 %v1098
    %v1190 = vunpack.c.l.b16 %v1099
    %v1191 = vunpack.c.h.b16 %v1099
    %v1192 = vunpack.c.l.b16 %v1100
    %v1193 = vunpack.c.h.b16 %v1100
    %v1194 = vunpack.c.l.b16 %v1101
    %v1195 = vunpack.c.h.b16 %v1101
    %v1196 = vunpack.c.l.b16 %v1102
    %v1197 = vunpack.c.h.b16 %v1102
    %v1198 = vunpack.c.l.b16 %v1103
    %v1199 = vunpack.c.h.b16 %v1103
    %v1200 = vpack.c.b16 %v1138, %v1136
    %v1201 = vpack.c.b16 %v1139, %v1137
    %v1202 = vpack.c.b16 %v1142, %v1140
    %v1203 = vpack.c.b16 %v1143, %v1141
    %v1204 = vpack.c.b16 %v1146, %v1144
    %v1205 = vpack.c.b16 %v1147, %v1145
    %v1206 = vpack.c.b16 %v1150, %v1148
    %v1207 = vpack.c.b16 %v1151, %v1149
    %v1208 = vpack.c.b16 %v1154, %v1152
    %v1209 = vpack.c.b16 %v1155, %v1153
    %v1210 = vpack.c.b16 %v1158, %v1156
    %v1211 = vpack.c.b16 %v1159, %v1157
    %v1212 = vpack.c.b16 %v1162, %v1160
    %v1213 = vpack.c.b16 %v1163, %v1161
    %v1214 = vpack.c.b16 %v1166, %v1164
    %v1215 = vpack.c.b16 %v1167, %v1165
    %v1216 = vpack.c.b16 %v1170, %v1168
    %v1217 = vpack.c.b16 %v1171, %v1169
    %v1218 = vpack.c.b16 %v1174, %v1172
    %v1219 = vpack.c.b16 %v1175, %v1173
    %v1220 = vpack.c.b16 %v1178, %v1176
    %v1221 = vpack.c.b16 %v1179, %v1177
    %v1222 = vpack.c.b16 %v1182, %v1180
    %v1223 = vpack.c.b16 %v1183, %v1181
    %v1224 = vpack.c.b16 %v1186, %v1184
    %v1225 = vpack.c.b16 %v1187, %v1185
    %v1226 = vpack.c.b16 %v1190, %v1188
    %v1227 = vpack.c.b16 %v1191, %v1189
    %v1228 = vpack.c.b16 %v1194, %v1192
    %v1229 = vpack.c.b16 %v1195, %v1193
    %v1230 = vpack.c.b16 %v1198, %v1196
    %v1231 = vpack.c.b16 %v1199, %v1197
    %1264 = vmatprep.subr.bf16.mxu0 %v1215
    %1265 = vmatpush1.bf16.msra.mxu0 %v1214
    %1266 = vmatprep.subr.bf16.mxu0 %v1213
    %1267 = vmatpush1.bf16.msra.mxu0 %v1212
    %1268 = vmatprep.subr.bf16.mxu0 %v1211
    %1269 = vmatpush1.bf16.msra.mxu0 %v1210
    %1270 = vmatprep.subr.bf16.mxu0 %v1209
    %1271 = vmatpush1.bf16.msra.mxu0 %v1208
    %1272 = vmatprep.subr.bf16.mxu0 %v1207
    %1273 = vmatpush1.bf16.msra.mxu0 %v1206
    %1274 = vmatprep.subr.bf16.mxu0 %v1205
    %1275 = vmatpush1.bf16.msra.mxu0 %v1204
    %1276 = vmatprep.subr.bf16.mxu0 %v1203
    %1277 = vmatpush1.bf16.msra.mxu0 %v1202
    %1278 = vmatprep.subr.bf16.mxu0 %v1201
    %1279 = vmatpush1.bf16.msra.mxu0 %v1200
    %1280 = vmatprep.subr.bf16.mxu0 %v1231
    %1281 = vmatpush2.bf16.msra.mxu0 %v1230
    %1282 = vmatprep.subr.bf16.mxu0 %v1229
    %1283 = vmatpush2.bf16.msra.mxu0 %v1228
    %1284 = vmatprep.subr.bf16.mxu0 %v1227
    %1285 = vmatpush2.bf16.msra.mxu0 %v1226
    %1286 = vmatprep.subr.bf16.mxu0 %v1225
    %1287 = vmatpush2.bf16.msra.mxu0 %v1224
    %1288 = vmatprep.subr.bf16.mxu0 %v1223
    %1289 = vmatpush2.bf16.msra.mxu0 %v1222
    %1290 = vmatprep.subr.bf16.mxu0 %v1221
    %1291 = vmatpush2.bf16.msra.mxu0 %v1220
    %1292 = vmatprep.subr.bf16.mxu0 %v1219
    %1293 = vmatpush2.bf16.msra.mxu0 %v1218
    %1294 = vmatprep.subr.bf16.mxu0 %v1217
    %1295 = vmatpush2.bf16.msra.mxu0 %v1216
    %1296 = vmatprep.mubr.bf16.mxu0 %v1071
    %1297 = vmatmul.mubr.bf16.gmra.mxu0 %v1070
    %v1298 = vpop.f32.mrf.mxu0
    %v1299 = vadd.f32 0.0, %v1298
    %v1300 = vpop.f32.mrf.mxu0
    %v1301 = vadd.f32 0.0, %v1300
    %v1302 = vpop.f32.mrf.mxu0
    %v1303 = vpop.f32.mrf.mxu0
    %1304 = vdwg.mxu0
    %v1305 = vmul.f32 %v1299, %v827
    %v1306 = vmul.f32 %v1301, %v829
    %v1307 = vpack.c.bf16 %v1305, %v1305
    %v1308 = vpack.c.bf16 %v1306, %v1306
    %v1309 = vld [vmem:[%s4] sm:$0xf]
    %v1310 = vld [vmem:[%s4 + $0x4] sm:$0xf]
    %v1311 = vld [vmem:[%s4 + $0x8] sm:$0xf]
    %v1312 = vld [vmem:[%s4 + $0xc] sm:$0xf]
    %v1313 = vld [vmem:[%s4 + $0x10] sm:$0xf]
    %v1314 = vld [vmem:[%s4 + $0x14] sm:$0xf]
    %v1315 = vld [vmem:[%s4 + $0x18] sm:$0xf]
    %v1316 = vld [vmem:[%s4 + $0x1c] sm:$0xf]
    %v1317 = vld [vmem:[%s4 + $0x20] sm:$0xf]
    %v1318 = vld [vmem:[%s4 + $0x24] sm:$0xf]
    %v1319 = vld [vmem:[%s4 + $0x28] sm:$0xf]
    %v1320 = vld [vmem:[%s4 + $0x2c] sm:$0xf]
    %v1321 = vld [vmem:[%s4 + $0x30] sm:$0xf]
    %v1322 = vld [vmem:[%s4 + $0x34] sm:$0xf]
    %v1323 = vld [vmem:[%s4 + $0x38] sm:$0xf]
    %v1324 = vld [vmem:[%s4 + $0x3c] sm:$0xf]
    %v1325 = vld [vmem:[%s4 + $0x40] sm:$0xf]
    %v1326 = vld [vmem:[%s4 + $0x44] sm:$0xf]
    %v1327 = vld [vmem:[%s4 + $0x48] sm:$0xf]
    %v1328 = vld [vmem:[%s4 + $0x4c] sm:$0xf]
    %v1329 = vld [vmem:[%s4 + $0x50] sm:$0xf]
    %v1330 = vld [vmem:[%s4 + $0x54] sm:$0xf]
    %v1331 = vld [vmem:[%s4 + $0x58] sm:$0xf]
    %v1332 = vld [vmem:[%s4 + $0x5c] sm:$0xf]
    %v1333 = vld [vmem:[%s4 + $0x60] sm:$0xf]
    %v1334 = vld [vmem:[%s4 + $0x64] sm:$0xf]
    %v1335 = vld [vmem:[%s4 + $0x68] sm:$0xf]
    %v1336 = vld [vmem:[%s4 + $0x6c] sm:$0xf]
    %v1337 = vld [vmem:[%s4 + $0x70] sm:$0xf]
    %v1338 = vld [vmem:[%s4 + $0x74] sm:$0xf]
    %v1339 = vld [vmem:[%s4 + $0x78] sm:$0xf]
    %v1340 = vld [vmem:[%s4 + $0x7c] sm:$0xf]
    %v1373 = vunpack.c.l.b16 %v1309
    %v1374 = vunpack.c.l.b16 %v1310
    %v1375 = vunpack.c.l.b16 %v1311
    %v1376 = vunpack.c.l.b16 %v1312
    %v1377 = vunpack.c.l.b16 %v1313
    %v1378 = vunpack.c.l.b16 %v1314
    %v1379 = vunpack.c.l.b16 %v1315
    %v1380 = vunpack.c.l.b16 %v1316
    %v1381 = vunpack.c.l.b16 %v1317
    %v1382 = vunpack.c.l.b16 %v1318
    %v1383 = vunpack.c.l.b16 %v1319
    %v1384 = vunpack.c.l.b16 %v1320
    %v1385 = vunpack.c.l.b16 %v1321
    %v1386 = vunpack.c.l.b16 %v1322
    %v1387 = vunpack.c.l.b16 %v1323
    %v1388 = vunpack.c.l.b16 %v1324
    %v1389 = vunpack.c.l.b16 %v1325
    %v1390 = vunpack.c.l.b16 %v1326
    %v1391 = vunpack.c.l.b16 %v1327
    %v1392 = vunpack.c.l.b16 %v1328
    %v1393 = vunpack.c.l.b16 %v1329
    %v1394 = vunpack.c.l.b16 %v1330
    %v1395 = vunpack.c.l.b16 %v1331
    %v1396 = vunpack.c.l.b16 %v1332
    %v1397 = vunpack.c.l.b16 %v1333
    %v1398 = vunpack.c.l.b16 %v1334
    %v1399 = vunpack.c.l.b16 %v1335
    %v1400 = vunpack.c.l.b16 %v1336
    %v1401 = vunpack.c.l.b16 %v1337
    %v1402 = vunpack.c.l.b16 %v1338
    %v1403 = vunpack.c.l.b16 %v1339
    %v1404 = vunpack.c.l.b16 %v1340
    %v1405 = vpack.c.b16 %v1374, %v1373
    %v1406 = vpack.c.b16 %v1376, %v1375
    %v1407 = vpack.c.b16 %v1378, %v1377
    %v1408 = vpack.c.b16 %v1380, %v1379
    %v1409 = vpack.c.b16 %v1382, %v1381
    %v1410 = vpack.c.b16 %v1384, %v1383
    %v1411 = vpack.c.b16 %v1386, %v1385
    %v1412 = vpack.c.b16 %v1388, %v1387
    %v1413 = vpack.c.b16 %v1390, %v1389
    %v1414 = vpack.c.b16 %v1392, %v1391
    %v1415 = vpack.c.b16 %v1394, %v1393
    %v1416 = vpack.c.b16 %v1396, %v1395
    %v1417 = vpack.c.b16 %v1398, %v1397
    %v1418 = vpack.c.b16 %v1400, %v1399
    %v1419 = vpack.c.b16 %v1402, %v1401
    %v1420 = vpack.c.b16 %v1404, %v1403
    %1437 = vmatprep.subr.bf16.mxu0 0
    %1438 = vmatpush1.bf16.msra.mxu0 %v1412
    %1439 = vmatprep.subr.bf16.mxu0 0
    %1440 = vmatpush1.bf16.msra.mxu0 %v1411
    %1441 = vmatprep.subr.bf16.mxu0 0
    %1442 = vmatpush1.bf16.msra.mxu0 %v1410
    %1443 = vmatprep.subr.bf16.mxu0 0
    %1444 = vmatpush1.bf16.msra.mxu0 %v1409
    %1445 = vmatprep.subr.bf16.mxu0 0
    %1446 = vmatpush1.bf16.msra.mxu0 %v1408
    %1447 = vmatprep.subr.bf16.mxu0 0
    %1448 = vmatpush1.bf16.msra.mxu0 %v1407
    %1449 = vmatprep.subr.bf16.mxu0 0
    %1450 = vmatpush1.bf16.msra.mxu0 %v1406
    %1451 = vmatprep.subr.bf16.mxu0 0
    %1452 = vmatpush1.bf16.msra.mxu0 %v1405
    %1453 = vmatprep.subr.bf16.mxu0 0
    %1454 = vmatpush2.bf16.msra.mxu0 %v1420
    %1455 = vmatprep.subr.bf16.mxu0 0
    %1456 = vmatpush2.bf16.msra.mxu0 %v1419
    %1457 = vmatprep.subr.bf16.mxu0 0
    %1458 = vmatpush2.bf16.msra.mxu0 %v1418
    %1459 = vmatprep.subr.bf16.mxu0 0
    %1460 = vmatpush2.bf16.msra.mxu0 %v1417
    %1461 = vmatprep.subr.bf16.mxu0 0
    %1462 = vmatpush2.bf16.msra.mxu0 %v1416
    %1463 = vmatprep.subr.bf16.mxu0 0
    %1464 = vmatpush2.bf16.msra.mxu0 %v1415
    %1465 = vmatprep.subr.bf16.mxu0 0
    %1466 = vmatpush2.bf16.msra.mxu0 %v1414
    %1467 = vmatprep.subr.bf16.mxu0 0
    %1468 = vmatpush2.bf16.msra.mxu0 %v1413
    %1469 = vmatprep.mubr.bf16.mxu0 %v1308
    %1470 = vmatmul.mubr.bf16.gmra.mxu0 %v1307
    %v1471 = vpop.f32.mrf.mxu0
    %v1472 = vadd.f32 0.0, %v1471
    %v1473 = vpop.f32.mrf.mxu0
    %v1474 = vpop.f32.mrf.mxu0
    %v1475 = vpop.f32.mrf.mxu0
    %1476 = vdwg.mxu0
    %vm1477 = vcmask 80896
    %1478 = vst.msk [vmem:[#allocation8] sm:$0xff] %vm1477, %v1472
    // Predicated region
    $region34: #{tpu_custom_call.1} parent=1 // pred_check
      _
    $region35: #{tpu_custom_call.1} parent=1 // pred_check_branch
      %1480 = sbr.rel (0) target = $region37
    $region36: #{tpu_custom_call.1} parent=1 // pred_region
      %s1482 = ssub.s32 128, 128
      %1483 = vsyncadd [#allocation4], %s1482
      %s1485 = sshll.u32 [#allocation8], 4
      %s1486 = int_to_ptr.vmem [resolvable:$true] %s1485
      %1488 = dma.vmem_to_hbm [thread:$0]  %s1486, 128, %s5, [#allocation4]
    $region37: #{tpu_custom_call.1} parent=1 // pred_fallthru
      _
    // Predicated region
    $region38: #{tpu_custom_call.1} parent=1 // pred_check
      _
    $region39: #{tpu_custom_call.1} parent=1 // pred_check_branch
      %1490 = sbr.rel (0) target = $region41
    $region40: #{tpu_custom_call.1} parent=1 // pred_region
      %1491 = dma.done [#allocation4], 128
    $region41: #{tpu_custom_call.1} parent=1 // pred_fallthru
      _
    %1492 = vsyncpa [#allocation3], 1
    %1493 = vsyncpa [#allocation6], 1
    %1494 = vsyncpa [#allocation4], 1

</llo_original>
